<compile_context>
chip_gen: v7x
topology: tpu7x:2x2x1
jax: 0.10.0
libtpu: 0.0.40
codegen_flags: <defaults>
</compile_context>

<pallas_src>
import functools

import jax
import jax.numpy as jnp
import numpy as np
from jax.experimental import pallas as pl
from jax.experimental.pallas import tpu as pltpu

# ----------------------------- problem sizes -----------------------------
B = 2            # batch
C_IN = 4         # input channels
H = W = 16       # spatial
HIDDEN = 32      # conv output channels
FEAT = 32        # backbone.out_features
NUM_CLASSES = 10


def _round_up(x, m):
    return ((x + m - 1) // m) * m


# ------------------------------- kernel ----------------------------------
def _cgc_kde_kernel(patches_ref,   # VMEM (K_PAD, B*HW)      bf16 im2col^T (+ ones bias row)
                    wconv_ref,     # VMEM (HIDDEN, K_PAD)    bf16 conv weight^T (+ bias col)
                    wfc_ref,       # VMEM (HIDDEN, FEAT_PAD) bf16, pre-scaled by 1/(H*W)
                    offset_ref,    # VMEM (B, FEAT_PAD)      f32  = pad(bfc - emb[y])
                    out_ref,       # VMEM (B, FEAT_PAD)      f32
                    *, batch, hw):
    # conv3x3 (pad=1) + bias as ONE transposed im2col matmul on the MXU.
    # Output (HIDDEN=32, B*HW) stays fully lane-dense (16 f32 vregs).
    conv_t = jnp.dot(wconv_ref[...], patches_ref[...],
                     preferred_element_type=jnp.float32)
    relu = jnp.maximum(conv_t, 0.0)                      # f32 elementwise (v5e-safe)

    # Global average pool: per-batch cross-lane reduce on the XLU.
    # The 1/(H*W) scale is folded into wfc by the wrapper.
    pooled_cols = [
        jnp.sum(relu[:, bi * hw:(bi + 1) * hw], axis=-1, keepdims=True)
        for bi in range(batch)
    ]
    pooled_t = jnp.concatenate(pooled_cols, axis=-1).astype(jnp.bfloat16)  # (HIDDEN, B)

    # Final linear layer: contract over HIDDEN (dim 0 of both operands),
    # then add the pre-fused (bfc - emb[y]) residual offset.
    feat = jax.lax.dot_general(pooled_t, wfc_ref[...],
                               dimension_numbers=(((0,), (0,)), ((), ())),
                               preferred_element_type=jnp.float32)         # (B, FEAT_PAD)
    out_ref[...] = (feat + offset_ref[...]).astype(out_ref.dtype)


# ------------------------------- wrapper ----------------------------------
@jax.jit
def cgc_kde_forward(x_nchw, y, params):
    """Residual = backbone(x) - embedding[y].  x_nchw: (B, C, H, W), y: (B,) int."""
    wconv, bconv, wfc, bfc, emb = params
    b, c, h, w = x_nchw.shape
    hidden = wconv.shape[-1]
    feat = wfc.shape[-1]
    hw = h * w

    k_aug = 9 * c + 1                          # 9*C_IN patch rows + 1 bias row
    k_pad = _round_up(k_aug, 16)               # bf16 sublane packing (36+1 -> 48)
    feat_pad = max(128, _round_up(feat, 128))  # lane-dense output width

    # ---- layout plumbing (all fused under jit) ----
    x = jnp.transpose(x_nchw, (0, 2, 3, 1)).astype(jnp.float32)          # NHWC
    xp = jnp.pad(x, ((0, 0), (1, 1), (1, 1), (0, 0)))
    cols = jnp.stack([xp[:, kh:kh + h, kw:kw + w, :]
                      for kh in range(3) for kw in range(3)], axis=0)    # (9,B,H,W,C)
    patches_t = jnp.transpose(cols, (0, 4, 1, 2, 3)).reshape(9 * c, b * hw)
    patches_aug = jnp.concatenate(
        [patches_t, jnp.ones((1, b * hw), jnp.float32)], axis=0)         # bias row
    patches_aug = jnp.pad(
        patches_aug, ((0, k_pad - k_aug), (0, 0))).astype(jnp.bfloat16)  # (K_PAD, B*HW)

    wconv_t = wconv.reshape(9 * c, hidden).astype(jnp.float32).T         # (HIDDEN, 9C)
    wconv_aug = jnp.concatenate(
        [wconv_t, bconv.reshape(hidden, 1).astype(jnp.float32)], axis=1)
    wconv_aug = jnp.pad(
        wconv_aug, ((0, 0), (0, k_pad - k_aug))).astype(jnp.bfloat16)    # (HIDDEN, K_PAD)

    # Fold the 1/(H*W) pooling scale into the FC weight; zero-pad to 128 lanes.
    wfc_pad = jnp.pad(wfc.astype(jnp.float32) / float(hw),
                      ((0, 0), (0, feat_pad - feat))).astype(jnp.bfloat16)

    # Fold the FC bias and the gathered embedding row into one f32 offset operand.
    offset = jnp.pad((bfc[None, :] - emb[y]).astype(jnp.float32),
                     ((0, 0), (0, feat_pad - feat)))

    flops = (2 * hidden * k_pad * (b * hw)       # conv matmul
             + hidden * b * hw                   # pooling adds
             + 2 * b * hidden * feat_pad)        # fc matmul
    bytes_accessed = ((patches_aug.size + wconv_aug.size + wfc_pad.size) * 2
                      + (offset.size + b * feat_pad) * 4)

    out = pl.pallas_call(
        functools.partial(_cgc_kde_kernel, batch=b, hw=hw),
        grid=(1,),
        in_specs=[
            pl.BlockSpec((k_pad, b * hw), lambda i: (0, 0)),
            pl.BlockSpec((hidden, k_pad), lambda i: (0, 0)),
            pl.BlockSpec((hidden, feat_pad), lambda i: (0, 0)),
            pl.BlockSpec((b, feat_pad), lambda i: (0, 0)),
        ],
        out_specs=pl.BlockSpec((b, feat_pad), lambda i: (0, 0)),
        out_shape=jax.ShapeDtypeStruct((b, feat_pad), jnp.float32),
        compiler_params=pltpu.CompilerParams(
            dimension_semantics=("arbitrary",)),
        cost_estimate=pl.CostEstimate(flops=flops, transcendentals=0,
                                      bytes_accessed=bytes_accessed),
    )(patches_aug, wconv_aug, wfc_pad, offset)

    return out[:, :feat]


# --------------------------- pure-JAX reference ----------------------------
def cgc_kde_reference(x_nchw, y, params):
    """f32 reference matching the PyTorch module semantics."""
    wconv, bconv, wfc, bfc, emb = params
    b, c, h, w = x_nchw.shape
    x = jnp.transpose(x_nchw, (0, 2, 3, 1)).astype(jnp.float32)
    xp = jnp.pad(x, ((0, 0), (1, 1), (1, 1), (0, 0)))
    conv = jnp.zeros((b, h, w, wconv.shape[-1]), jnp.float32)
    for kh in range(3):
        for kw in range(3):
            conv = conv + jnp.einsum(
                "bhwc,co->bhwo", xp[:, kh:kh + h, kw:kw + w, :], wconv[kh, kw])
    conv = jnp.maximum(conv + bconv, 0.0)
    pooled = conv.mean(axis=(1, 2))                       # (B, HIDDEN)
    feat = pooled @ wfc + bfc                             # (B, FEAT)
    return feat - emb[y]                                  # residual


# --------------------------------- main ------------------------------------
if __name__ == "__main__":
    key = jax.random.PRNGKey(0)
    kx, ky, k1, k2, k3, k4, k5 = jax.random.split(key, 7)

    # Deterministic synthetic parameters (no checkpoint loading).
    wconv = jax.random.normal(k1, (3, 3, C_IN, HIDDEN), jnp.float32) * 0.1
    bconv = jax.random.normal(k2, (HIDDEN,), jnp.float32) * 0.05
    wfc = jax.random.normal(k3, (HIDDEN, FEAT), jnp.float32) * 0.1
    bfc = jax.random.normal(k4, (FEAT,), jnp.float32) * 0.05
    emb = jax.random.normal(k5, (NUM_CLASSES, FEAT), jnp.float32) * 0.1
    params = (wconv, bconv, wfc, bfc, emb)

    # Inputs (PyTorch convention: NCHW images, integer class labels).
    x = jax.random.normal(kx, (B, C_IN, H, W), jnp.float32)
    y = jax.random.randint(ky, (B,), 0, NUM_CLASSES, jnp.int32)

    out = jax.block_until_ready(cgc_kde_forward(x, y, params))
    ref = jax.block_until_ready(cgc_kde_reference(x, y, params))

    # bf16 MXU inputs (f32 accumulation) vs. the f32 reference -> loose tolerance.
    np.testing.assert_allclose(np.asarray(out), np.asarray(ref),
                               rtol=2e-2, atol=2e-2)

    # TODO(synk): fit_kde / predict / joint_class_probability use sklearn
    # KernelDensity (host-side, data-dependent, non-tensor) and are not part
    # of the tensor forward pass; not implemented as a kernel.
    print("KERNEL_OK")
</pallas_src>

<mosaic_0001>
module attributes {stable_mosaic.version = 11 : i64} {
  func.func @_cgc_kde_kernel(%arg0: i32, %arg1: memref<48x512xbf16, #tpu.memory_space<vmem>>, %arg2: memref<32x48xbf16, #tpu.memory_space<vmem>>, %arg3: memref<32x128xbf16, #tpu.memory_space<vmem>>, %arg4: memref<2x128xf32, #tpu.memory_space<vmem>>, %arg5: memref<2x128xf32, #tpu.memory_space<vmem>>) attributes {dimension_semantics = [#tpu.dimension_semantics<arbitrary>], iteration_bounds = array<i64: 1>, scalar_prefetch = 0 : i64, scratch_operands = 0 : i64, tpu.core_type = #tpu.core_type<tc>, window_params = [{pipeline_mode = #tpu.pipeline_mode<synchronous>, transform_indices = @transform_0, window_bounds = array<i64: 48, 512>}, {pipeline_mode = #tpu.pipeline_mode<synchronous>, transform_indices = @transform_1, window_bounds = array<i64: 32, 48>}, {pipeline_mode = #tpu.pipeline_mode<synchronous>, transform_indices = @transform_2, window_bounds = array<i64: 32, 128>}, {pipeline_mode = #tpu.pipeline_mode<synchronous>, transform_indices = @transform_3, window_bounds = array<i64: 2, 128>}, {pipeline_mode = #tpu.pipeline_mode<synchronous>, transform_indices = @transform_4, window_bounds = array<i64: 2, 128>}]} {
    %c0 = arith.constant 0 : index
    %c0_0 = arith.constant 0 : index
    %0 = vector.load %arg2[%c0, %c0_0] : memref<32x48xbf16, #tpu.memory_space<vmem>>, vector<32x48xbf16>
    %c0_1 = arith.constant 0 : index
    %c0_2 = arith.constant 0 : index
    %1 = vector.load %arg1[%c0_1, %c0_2] : memref<48x512xbf16, #tpu.memory_space<vmem>>, vector<48x512xbf16>
    %cst = arith.constant dense<0.000000e+00> : vector<32x512xf32>
    %2 = tpu.matmul %0, %1, %cst {dimension_numbers = #tpu.dot_dimension_numbers<[1], [0], [0], [1], [0, 0, 1, 1], [], []>} : vector<32x48xbf16>, vector<48x512xbf16>, vector<32x512xf32> -> vector<32x512xf32>
    %cst_3 = arith.constant 0.000000e+00 : f32
    %3 = vector.broadcast %cst_3 : f32 to vector<32x512xf32>
    %4 = arith.maximumf %2, %3 : vector<32x512xf32>
    %5 = vector.extract_strided_slice %4 {offsets = [0, 0], sizes = [32, 256], strides = [1, 1]} : vector<32x512xf32> to vector<32x256xf32>
    %cst_4 = arith.constant dense<0.000000e+00> : vector<32xf32>
    %6 = vector.multi_reduction <add>, %5, %cst_4 [1] : vector<32x256xf32> to vector<32xf32>
    %7 = vector.shape_cast %6 : vector<32xf32> to vector<32x1xf32>
    %8 = vector.extract_strided_slice %4 {offsets = [0, 256], sizes = [32, 256], strides = [1, 1]} : vector<32x512xf32> to vector<32x256xf32>
    %cst_5 = arith.constant dense<0.000000e+00> : vector<32xf32>
    %9 = vector.multi_reduction <add>, %8, %cst_5 [1] : vector<32x256xf32> to vector<32xf32>
    %10 = vector.shape_cast %9 : vector<32xf32> to vector<32x1xf32>
    %11 = tpu.concatenate %7, %10 in 1 : vector<32x1xf32>, vector<32x1xf32> -> vector<32x2xf32>
    %12 = arith.truncf %11 : vector<32x2xf32> to vector<32x2xbf16>
    %c0_6 = arith.constant 0 : index
    %c0_7 = arith.constant 0 : index
    %13 = vector.load %arg3[%c0_6, %c0_7] : memref<32x128xbf16, #tpu.memory_space<vmem>>, vector<32x128xbf16>
    %cst_8 = arith.constant dense<0.000000e+00> : vector<2x128xf32>
    %14 = tpu.matmul %12, %13, %cst_8 {dimension_numbers = #tpu.dot_dimension_numbers<[0], [0], [1], [1], [0, 1, 1, 1], [], []>} : vector<32x2xbf16>, vector<32x128xbf16>, vector<2x128xf32> -> vector<2x128xf32>
    %c0_9 = arith.constant 0 : index
    %c0_10 = arith.constant 0 : index
    %15 = vector.load %arg4[%c0_9, %c0_10] : memref<2x128xf32, #tpu.memory_space<vmem>>, vector<2x128xf32>
    %16 = arith.addf %14, %15 : vector<2x128xf32>
    %c0_11 = arith.constant 0 : index
    %c0_12 = arith.constant 0 : index
    %17 = vector.load %arg5[%c0_11, %c0_12] : memref<2x128xf32, #tpu.memory_space<vmem>>, vector<2x128xf32>
    tpu.vector_store %arg5[%c0_11, %c0_12], %16 {strides = array<i32>} : memref<2x128xf32, #tpu.memory_space<vmem>>, vector<2x128xf32>,
    return
  }
  func.func @transform_0(%arg0: i32) -> (i32, i32) {
    %c0_i32 = arith.constant 0 : i32
    %c0_i32_0 = arith.constant 0 : i32
    %c0_i32_1 = arith.constant 0 : i32
    return %c0_i32, %c0_i32_0 : i32, i32
  }
  func.func @transform_1(%arg0: i32) -> (i32, i32) {
    %c0_i32 = arith.constant 0 : i32
    %c0_i32_0 = arith.constant 0 : i32
    %c0_i32_1 = arith.constant 0 : i32
    return %c0_i32, %c0_i32_0 : i32, i32
  }
  func.func @transform_2(%arg0: i32) -> (i32, i32) {
    %c0_i32 = arith.constant 0 : i32
    %c0_i32_0 = arith.constant 0 : i32
    %c0_i32_1 = arith.constant 0 : i32
    return %c0_i32, %c0_i32_0 : i32, i32
  }
  func.func @transform_3(%arg0: i32) -> (i32, i32) {
    %c0_i32 = arith.constant 0 : i32
    %c0_i32_0 = arith.constant 0 : i32
    %c0_i32_1 = arith.constant 0 : i32
    return %c0_i32, %c0_i32_0 : i32, i32
  }
  func.func @transform_4(%arg0: i32) -> (i32, i32) {
    %c0_i32 = arith.constant 0 : i32
    %c0_i32_0 = arith.constant 0 : i32
    %c0_i32_1 = arith.constant 0 : i32
    return %c0_i32, %c0_i32_0 : i32, i32
  }
}

</mosaic_0001>

<llo_original>
// kernel: cgc_kde_forward.1
$region0: #{cgc_kde_forward.1}
  #allocation0 [shape = 'u32[]', space=smem, size = 0x4, offset = 0x4, fixed_abs, tag = 'smem constant byte address 0x4 - core index']
  #allocation1 [shape = 'u32[144,128]{1,0:T(1,128)}', space=vmem, size = 0x12000, scoped, tag = 'internal scratch']
  %s0 = inlined_call_operand.vmem [shape: bf16[48,512], index: 0, kind: input, shape index: {}]
  %s1 = inlined_call_operand.vmem [shape: bf16[32,48], index: 1, kind: input, shape index: {}]
  %s2 = inlined_call_operand.vmem [shape: bf16[32,128], index: 2, kind: input, shape index: {}]
  %s3 = inlined_call_operand.vmem [shape: f32[2,128], index: 3, kind: input, shape index: {}]
  %s4 = inlined_call_operand.hbm [shape: f32[2,128], index: 4, kind: output, shape index: {}]
  %s5 = sld [smem:[#allocation0]]
  $region26: #{cgc_kde_forward.1} parent=0
    _
  %s7 = ssub.s32 1, %s5
  %s8 = scalar_select 0, %s7, %s5
  $region1: #{cgc_kde_forward.1} parent=0
    #allocation2 [shape = 'u8[1024]{0}', space=vmem, size = 0x400, scoped, tag = 'output window, operand 0, single buffered']
    #allocation3 [shape = 's32[1]{0}', space=sflag, size = 0x4, scoped, tag = 'scoped memory for cgc_kde_forward.1']
    %9 = vsyncpa [#allocation3], 0
    // Predicated region
    $region2: #{cgc_kde_forward.1} parent=1 // pred_check
      _
    $region3: #{cgc_kde_forward.1} parent=1 // pred_check_branch
      %11 = sbr.rel (0) target = $region5
    $region4: #{cgc_kde_forward.1} parent=1 // pred_region
      _
    $region5: #{cgc_kde_forward.1} parent=1 // pred_fallthru
      _
    // Predicated region
    $region6: #{cgc_kde_forward.1} parent=1 // pred_check
      _
    $region7: #{cgc_kde_forward.1} parent=1 // pred_check_branch
      %13 = sbr.rel (0) target = $region9
    $region8: #{cgc_kde_forward.1} parent=1 // pred_region
      _
    $region9: #{cgc_kde_forward.1} parent=1 // pred_fallthru
      _
    // Predicated region
    $region10: #{cgc_kde_forward.1} parent=1 // pred_check
      _
    $region11: #{cgc_kde_forward.1} parent=1 // pred_check_branch
      %15 = sbr.rel (0) target = $region13
    $region12: #{cgc_kde_forward.1} parent=1 // pred_region
      _
    $region13: #{cgc_kde_forward.1} parent=1 // pred_fallthru
      _
    // Predicated region
    $region14: #{cgc_kde_forward.1} parent=1 // pred_check
      _
    $region15: #{cgc_kde_forward.1} parent=1 // pred_check_branch
      %17 = sbr.rel (0) target = $region17
    $region16: #{cgc_kde_forward.1} parent=1 // pred_region
      _
    $region17: #{cgc_kde_forward.1} parent=1 // pred_fallthru
      _
    %v19 = vld [vmem:[%s1] sm:$0xf]
    %v20 = vld [vmem:[%s1 + $0x4] sm:$0xf]
    %v21 = vld [vmem:[%s1 + $0x8] sm:$0xf]
    %v22 = vld [vmem:[%s1 + $0xc] sm:$0xf]
    %v23 = vld [vmem:[%s0] sm:$0xff]
    %v24 = vld [vmem:[%s0 + $0x8] sm:$0xff]
    %v25 = vld [vmem:[%s0 + $0x10] sm:$0xff]
    %v26 = vld [vmem:[%s0 + $0x18] sm:$0xff]
    %v27 = vld [vmem:[%s0 + $0x20] sm:$0xff]
    %v28 = vld [vmem:[%s0 + $0x28] sm:$0xff]
    %v29 = vld [vmem:[%s0 + $0x30] sm:$0xff]
    %v30 = vld [vmem:[%s0 + $0x38] sm:$0xff]
    %v31 = vld [vmem:[%s0 + $0x40] sm:$0xff]
    %v32 = vld [vmem:[%s0 + $0x48] sm:$0xff]
    %v33 = vld [vmem:[%s0 + $0x50] sm:$0xff]
    %v34 = vld [vmem:[%s0 + $0x58] sm:$0xff]
    %v39 = vunpack.c.l.b16 %v19
    %v40 = vunpack.c.l.b16 %v20
    %v41 = vunpack.c.l.b16 %v21
    %v42 = vunpack.c.l.b16 %v22
    %v43 = vpack.c.b16 %v40, %v39
    %v44 = vpack.c.b16 %v42, %v41
    %v57 = vunpack.c.l.b16 %v23
    %v58 = vunpack.c.h.b16 %v23
    %v59 = vunpack.c.l.b16 %v24
    %v60 = vunpack.c.h.b16 %v24
    %v61 = vunpack.c.l.b16 %v25
    %v62 = vunpack.c.h.b16 %v25
    %v63 = vunpack.c.l.b16 %v26
    %v64 = vunpack.c.h.b16 %v26
    %v65 = vunpack.c.l.b16 %v27
    %v66 = vunpack.c.h.b16 %v27
    %v67 = vunpack.c.l.b16 %v28
    %v68 = vunpack.c.h.b16 %v28
    %v69 = vunpack.c.l.b16 %v29
    %v70 = vunpack.c.h.b16 %v29
    %v71 = vunpack.c.l.b16 %v30
    %v72 = vunpack.c.h.b16 %v30
    %v73 = vunpack.c.l.b16 %v31
    %v74 = vunpack.c.h.b16 %v31
    %v75 = vunpack.c.l.b16 %v32
    %v76 = vunpack.c.h.b16 %v32
    %v77 = vunpack.c.l.b16 %v33
    %v78 = vunpack.c.h.b16 %v33
    %v79 = vunpack.c.l.b16 %v34
    %v80 = vunpack.c.h.b16 %v34
    %v81 = vpack.c.b16 %v61, %v57
    %v82 = vpack.c.b16 %v62, %v58
    %v83 = vpack.c.b16 %v63, %v59
    %v84 = vpack.c.b16 %v64, %v60
    %v85 = vpack.c.b16 %v69, %v65
    %v86 = vpack.c.b16 %v70, %v66
    %v87 = vpack.c.b16 %v71, %v67
    %v88 = vpack.c.b16 %v72, %v68
    %v89 = vpack.c.b16 %v77, %v73
    %v90 = vpack.c.b16 %v78, %v74
    %v91 = vpack.c.b16 %v79, %v75
    %v92 = vpack.c.b16 %v80, %v76
    %vm105 = vcmask 392192
    %v107 = vsel %vm105, %v43, 0
    %v110 = vsel %vm105, %v44, 0
    %112 = vmatprep.subr.bf16.mxu0 %v82
    %113 = vmatpush1.bf16.msra.mxu0 %v81
    %114 = vmatprep.subr.bf16.mxu0 %v86
    %115 = vmatpush1.bf16.msra.mxu0 %v85
    %116 = vmatprep.subr.bf16.mxu0 %v90
    %117 = vmatpush1.bf16.msra.mxu0 %v89
    %118 = vmatprep.subr.bf16.mxu0 0
    %119 = vmatpush1.bf16.msra.mxu0 0
    %120 = vmatprep.subr.bf16.mxu0 0
    %121 = vmatpush1.bf16.msra.mxu0 0
    %122 = vmatprep.subr.bf16.mxu0 0
    %123 = vmatpush1.bf16.msra.mxu0 0
    %124 = vmatprep.subr.bf16.mxu0 0
    %125 = vmatpush1.bf16.msra.mxu0 0
    %126 = vmatprep.subr.bf16.mxu0 0
    %127 = vmatpush1.bf16.msra.mxu0 0
    %128 = vmatprep.subr.bf16.mxu0 0
    %129 = vmatpush1.bf16.msra.mxu0 0
    %130 = vmatprep.subr.bf16.mxu0 0
    %131 = vmatpush1.bf16.msra.mxu0 0
    %132 = vmatprep.subr.bf16.mxu0 0
    %133 = vmatpush1.bf16.msra.mxu0 0
    %134 = vmatprep.subr.bf16.mxu0 0
    %135 = vmatpush1.bf16.msra.mxu0 0
    %136 = vmatprep.subr.bf16.mxu0 0
    %137 = vmatpush1.bf16.msra.mxu0 0
    %138 = vmatprep.subr.bf16.mxu0 0
    %139 = vmatpush1.bf16.msra.mxu0 0
    %140 = vmatprep.subr.bf16.mxu0 0
    %141 = vmatpush1.bf16.msra.mxu0 0
    %142 = vmatprep.subr.bf16.mxu0 0
    %143 = vmatpush1.bf16.msra.mxu0 0
    %144 = vmatprep.mubr.bf16.mxu0 0
    %145 = vmatmul.mubr.bf16.gmra.mrb[0].mxu0 %v107
    %v146 = vpop.f32.mrb[0].mxu0
    %v147 = vadd.f32 0.0, %v146
    %v148 = vpop.f32.mrb[0].mxu0
    %v149 = vadd.f32 0.0, %v148
    %v150 = vpop.f32.mrb[0].mxu0
    %v151 = vadd.f32 0.0, %v150
    %v152 = vpop.f32.mrb[0].mxu0
    %v153 = vadd.f32 0.0, %v152
    %154 = vmatprep.mubr.bf16.mxu0 0
    %155 = vmatmul.mubr.bf16.gmra.mrb[0].mxu0 %v110
    %v156 = vpop.f32.mrb[0].mxu0
    %v157 = vadd.f32 0.0, %v156
    %v158 = vpop.f32.mrb[0].mxu0
    %v159 = vadd.f32 0.0, %v158
    %v160 = vpop.f32.mrb[0].mxu0
    %v161 = vadd.f32 0.0, %v160
    %v162 = vpop.f32.mrb[0].mxu0
    %v163 = vadd.f32 0.0, %v162
    %164 = vdwg.mxu0
    %165 = vmatprep.subr.bf16.mxu0 %v84
    %166 = vmatpush1.bf16.msra.mxu0 %v83
    %167 = vmatprep.subr.bf16.mxu0 %v88
    %168 = vmatpush1.bf16.msra.mxu0 %v87
    %169 = vmatprep.subr.bf16.mxu0 %v92
    %170 = vmatpush1.bf16.msra.mxu0 %v91
    %171 = vmatprep.subr.bf16.mxu0 0
    %172 = vmatpush1.bf16.msra.mxu0 0
    %173 = vmatprep.subr.bf16.mxu0 0
    %174 = vmatpush1.bf16.msra.mxu0 0
    %175 = vmatprep.subr.bf16.mxu0 0
    %176 = vmatpush1.bf16.msra.mxu0 0
    %177 = vmatprep.subr.bf16.mxu0 0
    %178 = vmatpush1.bf16.msra.mxu0 0
    %179 = vmatprep.subr.bf16.mxu0 0
    %180 = vmatpush1.bf16.msra.mxu0 0
    %181 = vmatprep.subr.bf16.mxu0 0
    %182 = vmatpush1.bf16.msra.mxu0 0
    %183 = vmatprep.subr.bf16.mxu0 0
    %184 = vmatpush1.bf16.msra.mxu0 0
    %185 = vmatprep.subr.bf16.mxu0 0
    %186 = vmatpush1.bf16.msra.mxu0 0
    %187 = vmatprep.subr.bf16.mxu0 0
    %188 = vmatpush1.bf16.msra.mxu0 0
    %189 = vmatprep.subr.bf16.mxu0 0
    %190 = vmatpush1.bf16.msra.mxu0 0
    %191 = vmatprep.subr.bf16.mxu0 0
    %192 = vmatpush1.bf16.msra.mxu0 0
    %193 = vmatprep.subr.bf16.mxu0 0
    %194 = vmatpush1.bf16.msra.mxu0 0
    %195 = vmatprep.subr.bf16.mxu0 0
    %196 = vmatpush1.bf16.msra.mxu0 0
    %197 = vmatprep.mubr.bf16.mxu0 0
    %198 = vmatmul.mubr.bf16.gmra.mrb[0].mxu0 %v107
    %v199 = vpop.f32.mrb[0].mxu0
    %v200 = vadd.f32 0.0, %v199
    %v201 = vpop.f32.mrb[0].mxu0
    %v202 = vadd.f32 0.0, %v201
    %v203 = vpop.f32.mrb[0].mxu0
    %v204 = vadd.f32 0.0, %v203
    %v205 = vpop.f32.mrb[0].mxu0
    %v206 = vadd.f32 0.0, %v205
    %207 = vmatprep.mubr.bf16.mxu0 0
    %208 = vmatmul.mubr.bf16.gmra.mrb[0].mxu0 %v110
    %v209 = vpop.f32.mrb[0].mxu0
    %v210 = vadd.f32 0.0, %v209
    %v211 = vpop.f32.mrb[0].mxu0
    %v212 = vadd.f32 0.0, %v211
    %v213 = vpop.f32.mrb[0].mxu0
    %v214 = vadd.f32 0.0, %v213
    %v215 = vpop.f32.mrb[0].mxu0
    %v216 = vadd.f32 0.0, %v215
    %217 = vdwg.mxu0
    %v218 = vmax.f32 %v147, 0.0
    %v219 = vmax.f32 %v149, 0.0
    %v220 = vmax.f32 %v200, 0.0
    %v221 = vmax.f32 %v202, 0.0
    %v222 = vmax.f32 %v151, 0.0
    %v223 = vmax.f32 %v153, 0.0
    %v224 = vmax.f32 %v204, 0.0
    %v225 = vmax.f32 %v206, 0.0
    %v226 = vmax.f32 %v157, 0.0
    %v227 = vmax.f32 %v159, 0.0
    %v228 = vmax.f32 %v210, 0.0
    %v229 = vmax.f32 %v212, 0.0
    %v230 = vmax.f32 %v161, 0.0
    %v231 = vmax.f32 %v163, 0.0
    %v232 = vmax.f32 %v214, 0.0
    %v233 = vmax.f32 %v216, 0.0
    %v234 = vadd.f32 %v218, %v219
    %235 = vadd.xlane.f32.xlu0 %v234
    %v236 = vpop.xlane.xlu0 %235
    %v237 = vadd.f32 %v222, %v223
    %238 = vadd.xlane.f32.xlu0 %v237
    %v239 = vpop.xlane.xlu0 %238
    %v240 = vadd.f32 %v226, %v227
    %241 = vadd.xlane.f32.xlu0 %v240
    %v242 = vpop.xlane.xlu0 %241
    %v243 = vadd.f32 %v230, %v231
    %244 = vadd.xlane.f32.xlu0 %v243
    %v245 = vpop.xlane.xlu0 %244
    %v246 = vadd.f32 %v220, %v221
    %247 = vadd.xlane.f32.xlu0 %v246
    %v248 = vpop.xlane.xlu0 %247
    %v249 = vadd.f32 %v224, %v225
    %250 = vadd.xlane.f32.xlu0 %v249
    %v251 = vpop.xlane.xlu0 %250
    %v252 = vadd.f32 %v228, %v229
    %253 = vadd.xlane.f32.xlu0 %v252
    %v254 = vpop.xlane.xlu0 %253
    %v255 = vadd.f32 %v232, %v233
    %256 = vadd.xlane.f32.xlu0 %v255
    %v257 = vpop.xlane.xlu0 %256
    %vm258 = vcmask 7168
    %v259 = vsel %vm258, %v236, %v248
    %v260 = vsel %vm258, %v239, %v251
    %v261 = vsel %vm258, %v242, %v254
    %v262 = vsel %vm258, %v245, %v257
    %v263 = vpack.c.bf16 %v260, %v259
    %v264 = vpack.c.bf16 %v262, %v261
    %v265 = vld [vmem:[%s2] sm:$0xf]
    %v266 = vld [vmem:[%s2 + $0x4] sm:$0xf]
    %v267 = vld [vmem:[%s2 + $0x8] sm:$0xf]
    %v268 = vld [vmem:[%s2 + $0xc] sm:$0xf]
    %v269 = vld [vmem:[%s3] sm:$0x3]
    %270 = vxpose.xlu0.c.b16.start [1/8] %v263, 128
    %271 = vxpose.xlu0.c.b16.cont [2/8] %v264, 128
    %272 = vxpose.xlu0.c.b16.cont [3/8] 0, 128
    %273 = vxpose.xlu0.c.b16.cont [4/8] 0, 128
    %274 = vxpose.xlu0.c.b16.cont [5/8] 0, 128
    %275 = vxpose.xlu0.c.b16.cont [6/8] 0, 128
    %276 = vxpose.xlu0.c.b16.cont [7/8] 0, 128
    %277 = vxpose.xlu0.c.b16.end [8/8] 0, 128
    %v278 = vpop.trf.xlu0
    %v279 = vpop.trf.xlu0
    %v280 = vpop.trf.xlu0
    %v281 = vpop.trf.xlu0
    %v282 = vpop.trf.xlu0
    %v283 = vpop.trf.xlu0
    %v284 = vpop.trf.xlu0
    %v285 = vpop.trf.xlu0
    %v290 = vunpack.c.l.b16 %v265
    %v291 = vunpack.c.l.b16 %v266
    %v292 = vunpack.c.l.b16 %v267
    %v293 = vunpack.c.l.b16 %v268
    %v294 = vpack.c.b16 %v291, %v290
    %v295 = vpack.c.b16 %v293, %v292
    %vm298 = vcmask 261120
    %v300 = vsel %vm298, %v278, 0
    %302 = vmatprep.subr.bf16.mxu0 0
    %303 = vmatpush1.bf16.msra.mxu0 %v294
    %304 = vmatprep.subr.bf16.mxu0 0
    %305 = vmatpush1.bf16.msra.mxu0 %v295
    %306 = vmatprep.subr.bf16.mxu0 0
    %307 = vmatpush1.bf16.msra.mxu0 0
    %308 = vmatprep.subr.bf16.mxu0 0
    %309 = vmatpush1.bf16.msra.mxu0 0
    %310 = vmatprep.subr.bf16.mxu0 0
    %311 = vmatpush1.bf16.msra.mxu0 0
    %312 = vmatprep.subr.bf16.mxu0 0
    %313 = vmatpush1.bf16.msra.mxu0 0
    %314 = vmatprep.subr.bf16.mxu0 0
    %315 = vmatpush1.bf16.msra.mxu0 0
    %316 = vmatprep.subr.bf16.mxu0 0
    %317 = vmatpush1.bf16.msra.mxu0 0
    %318 = vmatprep.subr.bf16.mxu0 0
    %319 = vmatpush1.bf16.msra.mxu0 0
    %320 = vmatprep.subr.bf16.mxu0 0
    %321 = vmatpush1.bf16.msra.mxu0 0
    %322 = vmatprep.subr.bf16.mxu0 0
    %323 = vmatpush1.bf16.msra.mxu0 0
    %324 = vmatprep.subr.bf16.mxu0 0
    %325 = vmatpush1.bf16.msra.mxu0 0
    %326 = vmatprep.subr.bf16.mxu0 0
    %327 = vmatpush1.bf16.msra.mxu0 0
    %328 = vmatprep.subr.bf16.mxu0 0
    %329 = vmatpush1.bf16.msra.mxu0 0
    %330 = vmatprep.subr.bf16.mxu0 0
    %331 = vmatpush1.bf16.msra.mxu0 0
    %332 = vmatprep.subr.bf16.mxu0 0
    %333 = vmatpush1.bf16.msra.mxu0 0
    %334 = vmatprep.mubr.bf16.mxu0 0
    %335 = vmatmul.mubr.bf16.gmra.mrb[0].mxu0 %v300
    %v336 = vpop.f32.mrb[0].mxu0
    %v337 = vadd.f32 %v269, %v336
    %v338 = vpop.f32.mrb[0].mxu0
    %v339 = vpop.f32.mrb[0].mxu0
    %v340 = vpop.f32.mrb[0].mxu0
    %341 = vdwg.mxu0
    %342 = vst [vmem:[#allocation2] sm:$0x3] %v337
    // Predicated region
    $region18: #{cgc_kde_forward.1} parent=1 // pred_check
      _
    $region19: #{cgc_kde_forward.1} parent=1 // pred_check_branch
      %344 = sbr.rel (0) target = $region21
    $region20: #{cgc_kde_forward.1} parent=1 // pred_region
      %s346 = ssub.s32 32, 32
      %347 = vsyncadd [#allocation3], %s346
      %s349 = sshll.u32 [#allocation2], 4
      %s350 = int_to_ptr.vmem [resolvable:$true] %s349
      %352 = dma.vmem_to_hbm [thread:$0]  %s350, 32, %s4, [#allocation3]
    $region21: #{cgc_kde_forward.1} parent=1 // pred_fallthru
      _
    // Predicated region
    $region22: #{cgc_kde_forward.1} parent=1 // pred_check
      _
    $region23: #{cgc_kde_forward.1} parent=1 // pred_check_branch
      %354 = sbr.rel (0) target = $region25
    $region24: #{cgc_kde_forward.1} parent=1 // pred_region
      %355 = dma.done [#allocation3], 32
    $region25: #{cgc_kde_forward.1} parent=1 // pred_fallthru
      _
    %356 = vsyncpa [#allocation3], 1

</llo_original>
